<compile_context>
chip_gen: v5e
topology: v5e:2x2
jax: 0.10.0
libtpu: 0.0.40
codegen_flags: <defaults>
</compile_context>

<pallas_src>
import math

import jax
import jax.numpy as jnp
from jax import lax
from jax.experimental import pallas as pl
from jax.experimental.pallas import tpu as pltpu


# ----------------------------- helpers -----------------------------

def _gelu_new(x):
    # HF / TransformerLens "gelu_new": 0.5*x*(1+tanh(sqrt(2/pi)*(x+0.044715*x^3)))
    c = math.sqrt(2.0 / math.pi)
    return 0.5 * x * (1.0 + jnp.tanh(c * (x + 0.044715 * x * x * x)))


def _round_up(n, m):
    return ((n + m - 1) // m) * m


def _cdiv(a, b):
    return (a + b - 1) // b


def _vmem_capacity_bytes():
    try:
        return int(pltpu.get_tpu_info().vmem_capacity_bytes)
    except Exception:
        return 64 * 1024 * 1024  # conservative fallback (v7x per-TensorCore)


def _choose_row_tiling(rows, row_tile_target, row_align):
    row_tile = min(_round_up(row_tile_target, row_align), _round_up(rows, row_align))
    row_tile = max(row_tile, row_align)
    n = _cdiv(rows, row_tile)
    if n > 1 and n % 2 == 1:
        # prefer an even tile count so v7x's two TensorCores split evenly
        row_tile_even = max(row_align, _round_up(_cdiv(rows, n + 1), row_align))
        n_even = _cdiv(rows, row_tile_even)
        if n_even % 2 == 0:
            row_tile, n = row_tile_even, n_even
    return row_tile, n, n * row_tile


# ----------------------------- kernels -----------------------------

def _make_resident_kernel(m_tile, n_m, ew_dtype):
    """Weights fully resident in VMEM; grid = (row_tiles,)."""

    def kernel(x_ref, win_ref, bin_ref, wout_ref, bout_ref, out_ref, acc_ref):
        acc_ref[...] = jnp.zeros_like(acc_ref)
        x = x_ref[...]  # hoisted: read the row tile once

        def step(off):
            # (row_tile, D) @ (D, m_tile) -- MXU, f32 accumulation
            pre = jnp.dot(x, win_ref[:, pl.ds(off, m_tile)],
                          preferred_element_type=jnp.float32)
            pre = pre.astype(ew_dtype) + bin_ref[:, pl.ds(off, m_tile)].astype(ew_dtype)
            act = _gelu_new(pre)
            # (row_tile, m_tile) @ (m_tile, D) -- accumulate into f32 scratch
            acc_ref[...] += jnp.dot(act.astype(wout_ref.dtype),
                                    wout_ref[pl.ds(off, m_tile), :],
                                    preferred_element_type=jnp.float32)

        if n_m <= 8:
            # static trip count & offsets -> static slices, fully schedulable
            for m in range(n_m):
                step(m * m_tile)
        else:
            def body(m, carry):
                step(pl.multiple_of(m * m_tile, 128))
                return carry
            lax.fori_loop(0, n_m, body, 0, unroll=False)

        out_ref[...] = (acc_ref[...] + bout_ref[...]).astype(out_ref.dtype)

    return kernel


def _make_streaming_kernel(m_tile, ew_dtype):
    """Weights streamed tile-by-tile; grid = (row_tiles, m_tiles) (axis 1 = reduction)."""

    def kernel(x_ref, win_ref, bin_ref, wout_ref, bout_ref, out_ref, acc_ref):
        m = pl.program_id(1)

        @pl.when(m == 0)
        def _init():
            acc_ref[...] = jnp.zeros_like(acc_ref)

        off = pl.multiple_of(m * m_tile, 128)
        pre = jnp.dot(x_ref[...], win_ref[...], preferred_element_type=jnp.float32)
        pre = pre.astype(ew_dtype) + bin_ref[:, pl.ds(off, m_tile)].astype(ew_dtype)
        act = _gelu_new(pre)
        acc_ref[...] += jnp.dot(act.astype(wout_ref.dtype), wout_ref[...],
                                preferred_element_type=jnp.float32)

        @pl.when(m == pl.num_programs(1) - 1)
        def _finalize():
            out_ref[...] = (acc_ref[...] + bout_ref[...]).astype(out_ref.dtype)

    return kernel


# ----------------------------- wrapper -----------------------------

def mlp_pallas(x, W_in, b_in, W_out, b_out, *,
               compute_dtype=None,          # None -> bf16 matmul inputs (f32 accumulation)
               elementwise_dtype=jnp.float32,  # keep f32 (safe on v5e); bf16 OK on v6e/v7x
               out_dtype=None,
               row_tile_target=512,
               m_tile_target=1024,
               force_streaming=False,
               vmem_capacity_bytes=None):
    """x: (B, S, D); W_in: (D, M); b_in: (M,); W_out: (M, D); b_out: (D,)."""
    B, S, D = x.shape
    M = W_in.shape[1]
    f32 = jnp.float32
    if compute_dtype is None:
        compute_dtype = jnp.bfloat16
    if out_dtype is None:
        out_dtype = x.dtype
    isz = jnp.dtype(compute_dtype).itemsize
    osz = jnp.dtype(out_dtype).itemsize

    # ---- row (batch*posn) tiling: parallel grid axis ----
    rows = B * S
    row_align = 8 if isz >= 4 else (16 if isz == 2 else 32)
    row_tile, n_row_tiles, rows_p = _choose_row_tiling(rows, row_tile_target, row_align)

    # ---- d_mlp tiling (lane-dense, multiple of 128) ----
    m_tile = max(128, _round_up(min(m_tile_target, _round_up(M, 128)), 128))
    m_pad = _round_up(M, m_tile)
    n_m = m_pad // m_tile

    # ---- pad + layout (zero padding is exact for this MLP) ----
    x2 = x.reshape(rows, D)
    if rows_p != rows:
        x2 = jnp.pad(x2, ((0, rows_p - rows), (0, 0)))
    W_in_p = jnp.pad(W_in, ((0, 0), (0, m_pad - M))) if m_pad != M else W_in
    W_out_p = jnp.pad(W_out, ((0, m_pad - M), (0, 0))) if m_pad != M else W_out
    b_in_p = jnp.pad(b_in, (0, m_pad - M)).reshape(1, m_pad).astype(f32)
    b_out_p = b_out.reshape(1, D).astype(f32)

    x2 = x2.astype(compute_dtype)
    W_in_p = W_in_p.astype(compute_dtype)
    W_out_p = W_out_p.astype(compute_dtype)

    # ---- VMEM budget & path selection ----
    if vmem_capacity_bytes is None:
        vmem_capacity_bytes = _vmem_capacity_bytes()
    usable = int(vmem_capacity_bytes * 0.80)  # headroom for Mosaic scratch/semaphores

    common = (2 * row_tile * D * isz           # x tile (double-buffered)
              + 2 * row_tile * D * osz         # out tile
              + row_tile * D * 4               # acc scratch (f32)
              + 2 * (m_pad + D) * 4            # resident biases (margin)
              + 2 * row_tile * m_tile * 4)     # pre/act temporaries
    resident_bytes = common + 2 * (2 * D * m_pad) * isz   # both weights, 2x margin
    stream_bytes = common + 2 * (D * m_tile + m_tile * D) * isz
    use_resident = (not force_streaming) and (resident_bytes <= usable)

    if use_resident:
        kernel = _make_resident_kernel(m_tile, n_m, elementwise_dtype)
        grid = (n_row_tiles,)
        in_specs = [
            pl.BlockSpec((row_tile, D), lambda r: (r, 0)),   # x
            pl.BlockSpec((D, m_pad), lambda r: (0, 0)),      # W_in (resident)
            pl.BlockSpec((1, m_pad), lambda r: (0, 0)),      # b_in (resident)
            pl.BlockSpec((m_pad, D), lambda r: (0, 0)),      # W_out (resident)
            pl.BlockSpec((1, D), lambda r: (0, 0)),          # b_out
        ]
        out_specs = pl.BlockSpec((row_tile, D), lambda r: (r, 0))
        dim_sem = ("parallel",)
        vmem_needed = resident_bytes
        weight_traffic = 2 * D * m_pad * isz
    else:
        kernel = _make_streaming_kernel(m_tile, elementwise_dtype)
        grid = (n_row_tiles, n_m)
        in_specs = [
            pl.BlockSpec((row_tile, D), lambda r, m: (r, 0)),  # x
            pl.BlockSpec((D, m_tile), lambda r, m: (0, m)),    # W_in tile
            pl.BlockSpec((1, m_pad), lambda r, m: (0, 0)),     # b_in (resident)
            pl.BlockSpec((m_tile, D), lambda r, m: (m, 0)),    # W_out tile
            pl.BlockSpec((1, D), lambda r, m: (0, 0)),         # b_out
        ]
        out_specs = pl.BlockSpec((row_tile, D), lambda r, m: (r, 0))
        dim_sem = ("parallel", "arbitrary")
        vmem_needed = stream_bytes
        weight_traffic = 2 * D * m_pad * isz * n_row_tiles

    vmem_limit = int(min(max(2 * vmem_needed, 16 * 1024 * 1024), usable))

    cost = pl.CostEstimate(
        flops=int(4 * rows_p * D * m_pad),
        transcendentals=int(rows_p * m_pad),
        bytes_accessed=int(rows_p * D * (isz + osz) + weight_traffic + (m_pad + D) * 4),
    )

    out_p = pl.pallas_call(
        kernel,
        grid=grid,
        in_specs=in_specs,
        out_specs=out_specs,
        out_shape=jax.ShapeDtypeStruct((rows_p, D), out_dtype),
        scratch_shapes=[pltpu.VMEM((row_tile, D), jnp.float32)],
        compiler_params=pltpu.CompilerParams(
            dimension_semantics=dim_sem,
            vmem_limit_bytes=vmem_limit,
        ),
        cost_estimate=cost,
    )(x2, W_in_p, b_in_p, W_out_p, b_out_p)

    return out_p[:rows].reshape(B, S, D)


# ----------------------------- pure-JAX reference -----------------------------

def mlp_reference(x, W_in, b_in, W_out, b_out):
    h = _gelu_new(jnp.einsum("bpd,dm->bpm", x, W_in) + b_in)
    return jnp.einsum("bpm,md->bpd", h, W_out) + b_out


# ----------------------------- main -----------------------------

if __name__ == "__main__":
    # Small shapes consistent with the module's (batch, posn, d_model) convention.
    batch, seq, d_model, d_mlp = 2, 8, 32, 64
    init_range = 0.02

    key = jax.random.PRNGKey(0)
    kx, kwi, kwo, kbi, kbo = jax.random.split(key, 5)
    x = jax.random.normal(kx, (batch, seq, d_model), jnp.float32)
    W_in = jax.random.normal(kwi, (d_model, d_mlp), jnp.float32) * init_range
    W_out = jax.random.normal(kwo, (d_mlp, d_model), jnp.float32) * init_range
    # non-zero biases so the bias path is actually exercised
    b_in = jax.random.normal(kbi, (d_mlp,), jnp.float32) * init_range
    b_out = jax.random.normal(kbo, (d_model,), jnp.float32) * init_range

    ref = mlp_reference(x, W_in, b_in, W_out, b_out)

    # 1) weight-resident fast path, f32 matmuls: tight tolerance vs f32 reference.
    out_res = mlp_pallas(x, W_in, b_in, W_out, b_out, compute_dtype=jnp.float32)
    out_res = jax.block_until_ready(out_res)
    assert out_res.shape == (batch, seq, d_model)
    assert jnp.allclose(out_res, ref, atol=1e-4, rtol=1e-4), "resident f32 mismatch"

    # 2) streaming fallback (forced), f32, small tiles so both grid axes are >1 / exercised.
    out_str = mlp_pallas(x, W_in, b_in, W_out, b_out, compute_dtype=jnp.float32,
                         force_streaming=True, row_tile_target=8, m_tile_target=128)
    out_str = jax.block_until_ready(out_str)
    assert jnp.allclose(out_str, ref, atol=1e-4, rtol=1e-4), "streaming f32 mismatch"

    # 3) default fast path (bf16 matmul inputs, f32 accumulation): loose tolerance.
    out_bf16 = mlp_pallas(x, W_in, b_in, W_out, b_out)
    out_bf16 = jax.block_until_ready(out_bf16)
    assert jnp.allclose(out_bf16, ref, atol=5e-3, rtol=5e-2), "bf16 kernel mismatch"

    # 4) larger hidden dim so the d_mlp reduction really has multiple steps
    #    (streaming grid axis and resident in-kernel loop both with n_m = 2).
    d_model2, d_mlp2 = 128, 256
    x2 = jax.random.normal(kx, (batch, seq, d_model2), jnp.float32)
    W_in2 = jax.random.normal(kwi, (d_model2, d_mlp2), jnp.float32) * init_range
    W_out2 = jax.random.normal(kwo, (d_mlp2, d_model2), jnp.float32) * init_range
    b_in2 = jax.random.normal(kbi, (d_mlp2,), jnp.float32) * init_range
    b_out2 = jax.random.normal(kbo, (d_model2,), jnp.float32) * init_range
    ref2 = mlp_reference(x2, W_in2, b_in2, W_out2, b_out2)

    out2_s = mlp_pallas(x2, W_in2, b_in2, W_out2, b_out2, compute_dtype=jnp.float32,
                        force_streaming=True, row_tile_target=8, m_tile_target=128)
    out2_s = jax.block_until_ready(out2_s)
    assert jnp.allclose(out2_s, ref2, atol=1e-4, rtol=1e-4), "streaming multi-step mismatch"

    out2_r = mlp_pallas(x2, W_in2, b_in2, W_out2, b_out2, compute_dtype=jnp.float32,
                        m_tile_target=128)
    out2_r = jax.block_until_ready(out2_r)
    assert jnp.allclose(out2_r, ref2, atol=1e-4, rtol=1e-4), "resident multi-step mismatch"

    print("KERNEL_OK")
</pallas_src>

<mosaic_0001>
module attributes {stable_mosaic.version = 11 : i64} {
  func.func @kernel(%arg0: i32, %arg1: memref<16x32xf32, #tpu.memory_space<vmem>>, %arg2: memref<32x128xf32, #tpu.memory_space<vmem>>, %arg3: memref<1x128xf32, #tpu.memory_space<vmem>>, %arg4: memref<128x32xf32, #tpu.memory_space<vmem>>, %arg5: memref<1x32xf32, #tpu.memory_space<vmem>>, %arg6: memref<16x32xf32, #tpu.memory_space<vmem>>, %arg7: memref<16x32xf32, #tpu.memory_space<vmem>>) attributes {dimension_semantics = [#tpu.dimension_semantics<parallel>], iteration_bounds = array<i64: 1>, scalar_prefetch = 0 : i64, scratch_operands = 1 : i64, tpu.core_type = #tpu.core_type<tc>, window_params = [{transform_indices = @transform_0, window_bounds = array<i64: 16, 32>}, {pipeline_mode = #tpu.pipeline_mode<synchronous>, transform_indices = @transform_1, window_bounds = array<i64: 32, 128>}, {pipeline_mode = #tpu.pipeline_mode<synchronous>, transform_indices = @transform_2, window_bounds = array<i64: 1, 128>}, {pipeline_mode = #tpu.pipeline_mode<synchronous>, transform_indices = @transform_3, window_bounds = array<i64: 128, 32>}, {pipeline_mode = #tpu.pipeline_mode<synchronous>, transform_indices = @transform_4, window_bounds = array<i64: 1, 32>}, {transform_indices = @transform_5, window_bounds = array<i64: 16, 32>}]} {
    %cst = arith.constant 0.000000e+00 : f32
    %0 = vector.broadcast %cst : f32 to vector<16x32xf32>
    %c0 = arith.constant 0 : index
    %c0_0 = arith.constant 0 : index
    %1 = vector.load %arg7[%c0, %c0_0] : memref<16x32xf32, #tpu.memory_space<vmem>>, vector<16x32xf32>
    tpu.vector_store %arg7[%c0, %c0_0], %0 {strides = array<i32>} : memref<16x32xf32, #tpu.memory_space<vmem>>, vector<16x32xf32>,
    %c0_1 = arith.constant 0 : index
    %c0_2 = arith.constant 0 : index
    %2 = vector.load %arg1[%c0_1, %c0_2] : memref<16x32xf32, #tpu.memory_space<vmem>>, vector<16x32xf32>
    %c0_3 = arith.constant 0 : index
    %c0_4 = arith.constant 0 : index
    %3 = vector.load %arg2[%c0_3, %c0_4] : memref<32x128xf32, #tpu.memory_space<vmem>>, vector<32x128xf32>
    %cst_5 = arith.constant dense<0.000000e+00> : vector<16x128xf32>
    %4 = tpu.matmul %2, %3, %cst_5 {dimension_numbers = #tpu.dot_dimension_numbers<[1], [0], [0], [1], [0, 0, 1, 1], [], []>} : vector<16x32xf32>, vector<32x128xf32>, vector<16x128xf32> -> vector<16x128xf32>
    %c0_6 = arith.constant 0 : index
    %c0_7 = arith.constant 0 : index
    %5 = vector.load %arg3[%c0_6, %c0_7] : memref<1x128xf32, #tpu.memory_space<vmem>>, vector<1x128xf32>
    %6 = vector.broadcast %5 : vector<1x128xf32> to vector<16x128xf32>
    %7 = arith.addf %4, %6 : vector<16x128xf32>
    %cst_8 = arith.constant 5.000000e-01 : f32
    %8 = vector.broadcast %cst_8 : f32 to vector<16x128xf32>
    %9 = arith.mulf %8, %7 : vector<16x128xf32>
    %cst_9 = arith.constant 4.471500e-02 : f32
    %10 = vector.broadcast %cst_9 : f32 to vector<16x128xf32>
    %11 = arith.mulf %10, %7 : vector<16x128xf32>
    %12 = arith.mulf %11, %7 : vector<16x128xf32>
    %13 = arith.mulf %12, %7 : vector<16x128xf32>
    %14 = arith.addf %7, %13 : vector<16x128xf32>
    %cst_10 = arith.constant 0.797884583 : f32
    %15 = vector.broadcast %cst_10 : f32 to vector<16x128xf32>
    %16 = arith.mulf %15, %14 : vector<16x128xf32>
    %17 = math.tanh %16 : vector<16x128xf32>
    %cst_11 = arith.constant 1.000000e+00 : f32
    %18 = vector.broadcast %cst_11 : f32 to vector<16x128xf32>
    %19 = arith.addf %18, %17 : vector<16x128xf32>
    %20 = arith.mulf %9, %19 : vector<16x128xf32>
    %c0_12 = arith.constant 0 : index
    %c0_13 = arith.constant 0 : index
    %21 = vector.load %arg7[%c0_12, %c0_13] : memref<16x32xf32, #tpu.memory_space<vmem>>, vector<16x32xf32>
    %c0_14 = arith.constant 0 : index
    %c0_15 = arith.constant 0 : index
    %22 = vector.load %arg4[%c0_14, %c0_15] : memref<128x32xf32, #tpu.memory_space<vmem>>, vector<128x32xf32>
    %cst_16 = arith.constant dense<0.000000e+00> : vector<16x32xf32>
    %23 = tpu.matmul %20, %22, %cst_16 {dimension_numbers = #tpu.dot_dimension_numbers<[1], [0], [0], [1], [0, 0, 1, 1], [], []>} : vector<16x128xf32>, vector<128x32xf32>, vector<16x32xf32> -> vector<16x32xf32>
    %24 = arith.addf %21, %23 : vector<16x32xf32>
    %c0_17 = arith.constant 0 : index
    %c0_18 = arith.constant 0 : index
    %25 = vector.load %arg7[%c0_17, %c0_18] : memref<16x32xf32, #tpu.memory_space<vmem>>, vector<16x32xf32>
    tpu.vector_store %arg7[%c0_17, %c0_18], %24 {strides = array<i32>} : memref<16x32xf32, #tpu.memory_space<vmem>>, vector<16x32xf32>,
    %c0_19 = arith.constant 0 : index
    %c0_20 = arith.constant 0 : index
    %26 = vector.load %arg7[%c0_19, %c0_20] : memref<16x32xf32, #tpu.memory_space<vmem>>, vector<16x32xf32>
    %c0_21 = arith.constant 0 : index
    %c0_22 = arith.constant 0 : index
    %27 = vector.load %arg5[%c0_21, %c0_22] : memref<1x32xf32, #tpu.memory_space<vmem>>, vector<1x32xf32>
    %28 = vector.broadcast %27 : vector<1x32xf32> to vector<16x32xf32>
    %29 = arith.addf %26, %28 : vector<16x32xf32>
    %c0_23 = arith.constant 0 : index
    %c0_24 = arith.constant 0 : index
    %30 = vector.load %arg6[%c0_23, %c0_24] : memref<16x32xf32, #tpu.memory_space<vmem>>, vector<16x32xf32>
    tpu.vector_store %arg6[%c0_23, %c0_24], %29 {strides = array<i32>} : memref<16x32xf32, #tpu.memory_space<vmem>>, vector<16x32xf32>,
    return
  }
  func.func @transform_0(%arg0: i32) -> (i32, i32) {
    %c0_i32 = arith.constant 0 : i32
    %c0_i32_0 = arith.constant 0 : i32
    return %arg0, %c0_i32 : i32, i32
  }
  func.func @transform_1(%arg0: i32) -> (i32, i32) {
    %c0_i32 = arith.constant 0 : i32
    %c0_i32_0 = arith.constant 0 : i32
    %c0_i32_1 = arith.constant 0 : i32
    return %c0_i32, %c0_i32_0 : i32, i32
  }
  func.func @transform_2(%arg0: i32) -> (i32, i32) {
    %c0_i32 = arith.constant 0 : i32
    %c0_i32_0 = arith.constant 0 : i32
    %c0_i32_1 = arith.constant 0 : i32
    return %c0_i32, %c0_i32_0 : i32, i32
  }
  func.func @transform_3(%arg0: i32) -> (i32, i32) {
    %c0_i32 = arith.constant 0 : i32
    %c0_i32_0 = arith.constant 0 : i32
    %c0_i32_1 = arith.constant 0 : i32
    return %c0_i32, %c0_i32_0 : i32, i32
  }
  func.func @transform_4(%arg0: i32) -> (i32, i32) {
    %c0_i32 = arith.constant 0 : i32
    %c0_i32_0 = arith.constant 0 : i32
    %c0_i32_1 = arith.constant 0 : i32
    return %c0_i32, %c0_i32_0 : i32, i32
  }
  func.func @transform_5(%arg0: i32) -> (i32, i32) {
    %c0_i32 = arith.constant 0 : i32
    %c0_i32_0 = arith.constant 0 : i32
    return %arg0, %c0_i32 : i32, i32
  }
}

</mosaic_0001>

<llo_original>
// kernel: tpu_custom_call.1
$region0: #{tpu_custom_call.1}
  #allocation0 [shape = 'u32[]', space=smem, size = 0x4, offset = 0x4, fixed_abs, tag = 'smem constant byte address 0x4 - core index']
  #allocation1 [shape = 'u32[72,128]{1,0:T(1,128)}', space=vmem, size = 0x9000, scoped, tag = 'internal scratch']
  #allocation2 [shape = 'f32[16,32]{1,0:T(8,128)}', space=vmem, size = 0x2000, scoped, tag = 'scratch operand']
  %s0 = inlined_call_operand.vmem [shape: f32[16,32], index: 0, kind: input, shape index: {}]
  %s1 = inlined_call_operand.vmem [shape: f32[32,128], index: 1, kind: input, shape index: {}]
  %s2 = inlined_call_operand.vmem [shape: f32[1,128], index: 2, kind: input, shape index: {}]
  %s3 = inlined_call_operand.vmem [shape: f32[128,32], index: 3, kind: input, shape index: {}]
  %s4 = inlined_call_operand.vmem [shape: f32[1,32], index: 4, kind: input, shape index: {}]
  %s5 = inlined_call_operand.hbm [shape: f32[16,32], index: 5, kind: output, shape index: {}]
  %s6 = sld [smem:[#allocation0]]
  $region30: #{tpu_custom_call.1} parent=0
    _
  %s8 = ssub.s32 1, %s6
  %s9 = scalar_select 0, %s8, %s6
  $region1: #{tpu_custom_call.1} parent=0
    #allocation3 [shape = 'u8[8192]{0}', space=vmem, size = 0x2000, scoped, tag = 'output window, operand 0, single buffered']
    #allocation4 [shape = 's32[1]{0}', space=sflag, size = 0x4, scoped, tag = 'scoped memory for tpu_custom_call.1']
    %10 = vsyncpa [#allocation4], 0
    // Predicated region
    $region2: #{tpu_custom_call.1} parent=1 // pred_check
      _
    $region3: #{tpu_custom_call.1} parent=1 // pred_check_branch
      %12 = sbr.rel (0) target = $region5
    $region4: #{tpu_custom_call.1} parent=1 // pred_region
      _
    $region5: #{tpu_custom_call.1} parent=1 // pred_fallthru
      _
    // Predicated region
    $region6: #{tpu_custom_call.1} parent=1 // pred_check
      _
    $region7: #{tpu_custom_call.1} parent=1 // pred_check_branch
      %14 = sbr.rel (0) target = $region9
    $region8: #{tpu_custom_call.1} parent=1 // pred_region
      _
    $region9: #{tpu_custom_call.1} parent=1 // pred_fallthru
      _
    // Predicated region
    $region10: #{tpu_custom_call.1} parent=1 // pred_check
      _
    $region11: #{tpu_custom_call.1} parent=1 // pred_check_branch
      %16 = sbr.rel (0) target = $region13
    $region12: #{tpu_custom_call.1} parent=1 // pred_region
      _
    $region13: #{tpu_custom_call.1} parent=1 // pred_fallthru
      _
    // Predicated region
    $region14: #{tpu_custom_call.1} parent=1 // pred_check
      _
    $region15: #{tpu_custom_call.1} parent=1 // pred_check_branch
      %18 = sbr.rel (0) target = $region17
    $region16: #{tpu_custom_call.1} parent=1 // pred_region
      _
    $region17: #{tpu_custom_call.1} parent=1 // pred_fallthru
      _
    // Predicated region
    $region18: #{tpu_custom_call.1} parent=1 // pred_check
      _
    $region19: #{tpu_custom_call.1} parent=1 // pred_check_branch
      %20 = sbr.rel (0) target = $region21
    $region20: #{tpu_custom_call.1} parent=1 // pred_region
      _
    $region21: #{tpu_custom_call.1} parent=1 // pred_fallthru
      _
    %vm21 = vcmask 261120
    %22 = vst.msk [vmem:[#allocation2] sm:$0xff] %vm21, 0.0
    %23 = vst.msk [vmem:[#allocation2 + $0x8] sm:$0xff] %vm21, 0.0
    %v24 = vld [vmem:[%s0] sm:$0xff]
    %v25 = vld [vmem:[%s0 + $0x8] sm:$0xff]
    %v26 = vld [vmem:[%s1] sm:$0xff]
    %v27 = vld [vmem:[%s1 + $0x8] sm:$0xff]
    %v28 = vld [vmem:[%s1 + $0x10] sm:$0xff]
    %v29 = vld [vmem:[%s1 + $0x18] sm:$0xff]
    %v30 = vld [vmem:[%s2] sm:$0x1]
    %v32 = vperm.slane %v30, 0
    %v35 = vsel %vm21, %v24, 0
    %v38 = vsel %vm21, %v25, 0
    %40 = vmatpush.msra.mxu0 0.0
    %41 = vmatpush.msra.mxu0 0.0
    %42 = vmatpush.msra.mxu0 0.0
    %43 = vmatpush.msra.mxu0 0.0
    %44 = vmatpush.msra.mxu0 0.0
    %45 = vmatpush.msra.mxu0 0.0
    %46 = vmatpush.msra.mxu0 0.0
    %47 = vmatpush.msra.mxu0 0.0
    %48 = vmatpush.msra.mxu0 0.0
    %49 = vmatpush.msra.mxu0 0.0
    %50 = vmatpush.msra.mxu0 0.0
    %51 = vmatpush.msra.mxu0 0.0
    %52 = vmatpush.msra.mxu0 %v29
    %53 = vmatpush.msra.mxu0 %v28
    %54 = vmatpush.msra.mxu0 %v27
    %55 = vmatpush.msra.mxu0 %v26
    %56 = vmatmul.f32.gmra.mxu0 %v35
    %v57 = vpop.f32.mrf.mxu0
    %v58 = vadd.f32 %v32, %v57
    %59 = vmatmul.f32.gmra.mxu0 %v38
    %v60 = vpop.f32.mrf.mxu0
    %v61 = vadd.f32 %v32, %v60
    %62 = vdwg.mxu0
    %v63 = vmul.f32 %v58, 0.5
    %v64 = vmul.f32 %v61, 0.5
    %v65 = vmul.f32 %v58, 0.044715
    %v66 = vmul.f32 %v61, 0.044715
    %v67 = vmul.f32 %v65, %v58
    %v68 = vmul.f32 %v66, %v61
    %v69 = vmul.f32 %v67, %v58
    %v70 = vmul.f32 %v68, %v61
    %v71 = vadd.f32 %v58, %v69
    %v72 = vadd.f32 %v61, %v70
    %v73 = vmul.f32 %v71, 0.7978846
    %v74 = vmul.f32 %v72, 0.7978846
    %v75 = vtanh.pop %v73
    %v76 = vtanh.pop %v74
    %v77 = vadd.f32 %v75, 1.0
    %v78 = vadd.f32 %v76, 1.0
    %v79 = vmul.f32 %v63, %v77
    %v80 = vmul.f32 %v64, %v78
    %v81 = vld [vmem:[#allocation2] sm:$0xff]
    %v82 = vld [vmem:[#allocation2 + $0x8] sm:$0xff]
    %v83 = vld [vmem:[%s3] sm:$0xff]
    %v84 = vld [vmem:[%s3 + $0x8] sm:$0xff]
    %v85 = vld [vmem:[%s3 + $0x10] sm:$0xff]
    %v86 = vld [vmem:[%s3 + $0x18] sm:$0xff]
    %v87 = vld [vmem:[%s3 + $0x20] sm:$0xff]
    %v88 = vld [vmem:[%s3 + $0x28] sm:$0xff]
    %v89 = vld [vmem:[%s3 + $0x30] sm:$0xff]
    %v90 = vld [vmem:[%s3 + $0x38] sm:$0xff]
    %v91 = vld [vmem:[%s3 + $0x40] sm:$0xff]
    %v92 = vld [vmem:[%s3 + $0x48] sm:$0xff]
    %v93 = vld [vmem:[%s3 + $0x50] sm:$0xff]
    %v94 = vld [vmem:[%s3 + $0x58] sm:$0xff]
    %v95 = vld [vmem:[%s3 + $0x60] sm:$0xff]
    %v96 = vld [vmem:[%s3 + $0x68] sm:$0xff]
    %v97 = vld [vmem:[%s3 + $0x70] sm:$0xff]
    %v98 = vld [vmem:[%s3 + $0x78] sm:$0xff]
    %99 = vmatpush.msra.mxu0 %v98
    %100 = vmatpush.msra.mxu0 %v97
    %101 = vmatpush.msra.mxu0 %v96
    %102 = vmatpush.msra.mxu0 %v95
    %103 = vmatpush.msra.mxu0 %v94
    %104 = vmatpush.msra.mxu0 %v93
    %105 = vmatpush.msra.mxu0 %v92
    %106 = vmatpush.msra.mxu0 %v91
    %107 = vmatpush.msra.mxu0 %v90
    %108 = vmatpush.msra.mxu0 %v89
    %109 = vmatpush.msra.mxu0 %v88
    %110 = vmatpush.msra.mxu0 %v87
    %111 = vmatpush.msra.mxu0 %v86
    %112 = vmatpush.msra.mxu0 %v85
    %113 = vmatpush.msra.mxu0 %v84
    %114 = vmatpush.msra.mxu0 %v83
    %115 = vmatmul.f32.gmra.mxu0 %v79
    %v116 = vpop.f32.mrf.mxu0
    %v117 = vadd.f32 0.0, %v116
    %118 = vmatmul.f32.gmra.mxu0 %v80
    %v119 = vpop.f32.mrf.mxu0
    %v120 = vadd.f32 0.0, %v119
    %121 = vdwg.mxu0
    %v122 = vadd.f32 %v81, %v117
    %v123 = vadd.f32 %v82, %v120
    %124 = vst.msk [vmem:[#allocation2] sm:$0xff] %vm21, %v122
    %125 = vst.msk [vmem:[#allocation2 + $0x8] sm:$0xff] %vm21, %v123
    %v126 = vld [vmem:[#allocation2] sm:$0xff]
    %v127 = vld [vmem:[#allocation2 + $0x8] sm:$0xff]
    %v128 = vld [vmem:[%s4] sm:$0x1]
    %v130 = vperm.slane %v128, 0
    %v132 = vadd.f32 %v126, %v130
    %v133 = vadd.f32 %v127, %v130
    %134 = vst.msk [vmem:[#allocation3] sm:$0xff] %vm21, %v132
    %135 = vst.msk [vmem:[#allocation3 + $0x8] sm:$0xff] %vm21, %v133
    // Predicated region
    $region22: #{tpu_custom_call.1} parent=1 // pred_check
      _
    $region23: #{tpu_custom_call.1} parent=1 // pred_check_branch
      %137 = sbr.rel (0) target = $region25
    $region24: #{tpu_custom_call.1} parent=1 // pred_region
      %139 = vsyncadd [#allocation4], 0
      %s140 = sshll.u32 [#allocation3], 4
      %s141 = int_to_ptr.vmem [resolvable:$true] %s140
      %s142 = sshll.u32 %s5, 4
      %s143 = int_to_ptr.hbm [resolvable:$true] %s142
      %148 = dma.vmem_to_hbm [thread:$0]  %s141, 256, %s143, [#allocation4], 128, 128, 8
    $region25: #{tpu_custom_call.1} parent=1 // pred_fallthru
      _
    // Predicated region
    $region26: #{tpu_custom_call.1} parent=1 // pred_check
      _
    $region27: #{tpu_custom_call.1} parent=1 // pred_check_branch
      %150 = sbr.rel (0) target = $region29
    $region28: #{tpu_custom_call.1} parent=1 // pred_region
      %152 = dma.done [#allocation4], 256
    $region29: #{tpu_custom_call.1} parent=1 // pred_fallthru
      _
    %153 = vsyncpa [#allocation4], 1

</llo_original>
